<compile_context>
chip_gen: v5e
topology: v5e:2x2
jax: 0.10.0
libtpu: 0.0.40
codegen_flags: <defaults>
</compile_context>

<pallas_src>
import jax
import jax.numpy as jnp
from jax.experimental import pallas as pl
from jax.experimental.pallas import tpu as pltpu


def _quad_kernel(params_ref, x_ref, o_ref):
    # params_ref: SMEM f32[3] = [weight2, weights, bias]
    w2 = params_ref[0]
    w1 = params_ref[1]
    b = params_ref[2]
    # Upcast per-vreg so compute is f32 on every chip generation (v5e has no
    # bf16 VALU); I/O dtype stays whatever the caller provided.
    x = x_ref[...].astype(jnp.float32)
    # Horner form: 2 muls + 2 adds per element.
    o_ref[...] = ((w2 * x + w1) * x + b).astype(o_ref.dtype)


def _round_up(v, m):
    return ((v + m - 1) // m) * m


def _pick_layout(bulk_n, itemsize, target_tile_bytes=4 << 20,
                 min_split_bytes=512 << 10):
    """Choose (lanes, rows, tile_rows) for a flat slab of bulk_n (%128==0) elems."""
    # Widest lane dim that divides bulk_n exactly -> lane-dense unmasked stores.
    lanes = 128
    for cand in (1024, 512, 256, 128):
        if bulk_n % cand == 0:
            lanes = cand
            break
    rows = bulk_n // lanes
    row_bytes = lanes * itemsize

    # ~4 MiB input tiles; tile_rows is a multiple of 8 (sublane rule) unless it
    # equals the full row extent.
    t = max(8, (target_tile_bytes // row_bytes) // 8 * 8)

    if rows <= t:
        # Whole slab fits in one tile.  For large-enough inputs still split in
        # two so both v7x TensorCores get a grid step; tiny inputs stay single
        # block (per-step overhead would dominate otherwise).
        if rows >= 16 and rows * row_bytes >= min_split_bytes:
            tile_rows = min(_round_up(pl.cdiv(rows, 2), 8), rows)
            return lanes, rows, tile_rows
        return lanes, rows, rows          # one block == full array dims
    return lanes, rows, t                 # last grid block may be partial


def quadratic_with_shift(x, weight2, weights, bias):
    """x: arbitrary-shape float array (e.g. NCHW). Params: (1,) f32."""
    orig_shape = x.shape
    # Keep f32 / bf16 end-to-end; anything else computes & returns f32
    # (matches PyTorch type promotion against the module's f32 parameters).
    io_dtype = x.dtype if x.dtype in (jnp.float32, jnp.bfloat16) else jnp.float32
    x = x.astype(io_dtype)
    n = x.size
    itemsize = jnp.dtype(io_dtype).itemsize

    params = jnp.concatenate(
        [weight2.reshape(-1), weights.reshape(-1), bias.reshape(-1)]
    ).astype(jnp.float32)

    def _jnp_quad(v):  # tiny fused epilogue for sub-128-element tails
        vf = v.astype(jnp.float32)
        return ((params[0] * vf + params[1]) * vf + params[2]).astype(io_dtype)

    x_flat = x.reshape(-1)
    rem = n % 128
    bulk_n = n - rem

    if bulk_n == 0:  # input smaller than one vreg row: kernel not worth it
        return _jnp_quad(x_flat).reshape(orig_shape)

    lanes, rows, tile_rows = _pick_layout(bulk_n, itemsize)
    x_2d = (x_flat[:bulk_n] if rem else x_flat).reshape(rows, lanes)

    grid = (pl.cdiv(rows, tile_rows),)

    out_2d = pl.pallas_call(
        _quad_kernel,
        out_shape=jax.ShapeDtypeStruct((rows, lanes), io_dtype),
        grid_spec=pltpu.PrefetchScalarGridSpec(
            num_scalar_prefetch=0,
            grid=grid,
            in_specs=[
                pl.BlockSpec(memory_space=pltpu.SMEM),               # params (3,)
                pl.BlockSpec((tile_rows, lanes), lambda i: (i, 0)),  # x tile
            ],
            out_specs=pl.BlockSpec((tile_rows, lanes), lambda i: (i, 0)),
        ),
        compiler_params=pltpu.CompilerParams(
            dimension_semantics=("parallel",),      # megacore-shard grid steps
            vmem_limit_bytes=32 * 1024 * 1024,      # keeps 4 MiB tiles legal on v5e
        ),
    )(params, x_2d)

    out_flat = out_2d.reshape(-1)
    if rem:
        out_flat = jnp.concatenate([out_flat, _jnp_quad(x_flat[bulk_n:])])
    return out_flat.reshape(orig_shape)


if __name__ == "__main__":
    key = jax.random.PRNGKey(0)
    kx, kw, kb, kx2 = jax.random.split(key, 4)

    # Deterministic parameter init (matches torch.randn(1)-style shapes).
    weights = jax.random.normal(kw, (1,), dtype=jnp.float32)   # self.weights
    weight2 = jnp.array([1.0], dtype=jnp.float32)              # self.weight2
    bias = jax.random.normal(kb, (1,), dtype=jnp.float32)      # self.bias

    # Small NCHW input consistent with an elementwise module.
    x = jax.random.normal(kx, (2, 4, 16, 16), dtype=jnp.float32)
    out = jax.block_until_ready(quadratic_with_shift(x, weight2, weights, bias))
    ref = weight2 * x ** 2 + weights * x + bias
    assert out.shape == x.shape and out.dtype == x.dtype
    assert jnp.allclose(out, ref, atol=1e-5, rtol=1e-5)

    # Ragged element count (not a multiple of 128): bulk via kernel, tail via jnp.
    x2 = jax.random.normal(kx2, (7, 37), dtype=jnp.float32)
    out2 = jax.block_until_ready(quadratic_with_shift(x2, weight2, weights, bias))
    ref2 = weight2 * x2 ** 2 + weights * x2 + bias
    assert out2.shape == x2.shape and out2.dtype == x2.dtype
    assert jnp.allclose(out2, ref2, atol=1e-5, rtol=1e-5)

    print("KERNEL_OK")
</pallas_src>

<mosaic_0001>
module attributes {stable_mosaic.version = 11 : i64} {
  func.func @_quad_kernel(%arg0: i32, %arg1: memref<3xf32, #tpu.memory_space<smem>>, %arg2: memref<2x1024xf32, #tpu.memory_space<vmem>>, %arg3: memref<2x1024xf32, #tpu.memory_space<vmem>>) attributes {dimension_semantics = [#tpu.dimension_semantics<parallel>], iteration_bounds = array<i64: 1>, scalar_prefetch = 0 : i64, scratch_operands = 0 : i64, tpu.core_type = #tpu.core_type<tc>, window_params = [{transform_indices = @transform_0, window_bounds = array<i64: 3>}, {transform_indices = @transform_1, window_bounds = array<i64: 2, 1024>}, {transform_indices = @transform_2, window_bounds = array<i64: 2, 1024>}]} {
    %c0 = arith.constant 0 : index
    %0 = memref.load %arg1[%c0] : memref<3xf32, #tpu.memory_space<smem>>
    %c1 = arith.constant 1 : index
    %1 = memref.load %arg1[%c1] : memref<3xf32, #tpu.memory_space<smem>>
    %c2 = arith.constant 2 : index
    %2 = memref.load %arg1[%c2] : memref<3xf32, #tpu.memory_space<smem>>
    %c0_0 = arith.constant 0 : index
    %c0_1 = arith.constant 0 : index
    %3 = vector.load %arg2[%c0_0, %c0_1] : memref<2x1024xf32, #tpu.memory_space<vmem>>, vector<2x1024xf32>
    %4 = vector.broadcast %0 : f32 to vector<2x1024xf32>
    %5 = arith.mulf %4, %3 : vector<2x1024xf32>
    %6 = vector.broadcast %1 : f32 to vector<2x1024xf32>
    %7 = arith.addf %5, %6 : vector<2x1024xf32>
    %8 = arith.mulf %7, %3 : vector<2x1024xf32>
    %9 = vector.broadcast %2 : f32 to vector<2x1024xf32>
    %10 = arith.addf %8, %9 : vector<2x1024xf32>
    %c0_2 = arith.constant 0 : index
    %c0_3 = arith.constant 0 : index
    %11 = vector.load %arg3[%c0_2, %c0_3] : memref<2x1024xf32, #tpu.memory_space<vmem>>, vector<2x1024xf32>
    tpu.vector_store %arg3[%c0_2, %c0_3], %10 {strides = array<i32>} : memref<2x1024xf32, #tpu.memory_space<vmem>>, vector<2x1024xf32>,
    return
  }
  func.func @transform_0(%arg0: i32) -> i32 {
    %c0_i32 = arith.constant 0 : i32
    %c0_i32_0 = arith.constant 0 : i32
    return %c0_i32 : i32
  }
  func.func @transform_1(%arg0: i32) -> (i32, i32) {
    %c0_i32 = arith.constant 0 : i32
    %c0_i32_0 = arith.constant 0 : i32
    return %arg0, %c0_i32 : i32, i32
  }
  func.func @transform_2(%arg0: i32) -> (i32, i32) {
    %c0_i32 = arith.constant 0 : i32
    %c0_i32_0 = arith.constant 0 : i32
    return %arg0, %c0_i32 : i32, i32
  }
}

</mosaic_0001>

<llo_original>
// kernel: tpu_custom_call.1
$region0: #{tpu_custom_call.1}
  #allocation0 [shape = 'u32[]', space=smem, size = 0x4, offset = 0x4, fixed_abs, tag = 'smem constant byte address 0x4 - core index']
  #allocation1 [shape = 'u32[72,128]{1,0:T(1,128)}', space=vmem, size = 0x9000, scoped, tag = 'internal scratch']
  %s0 = inlined_call_operand.hbm [shape: f32[3], index: 0, kind: input, shape index: {}]
  %s1 = inlined_call_operand.hbm [shape: f32[2,1024], index: 1, kind: input, shape index: {}]
  %s2 = inlined_call_operand.hbm [shape: f32[2,1024], index: 2, kind: output, shape index: {}]
  %s3 = sld [smem:[#allocation0]]
  $region26: #{tpu_custom_call.1} parent=0
    _
  %s5 = ssub.s32 1, %s3
  %s6 = scalar_select 0, %s5, %s3
  $region1: #{tpu_custom_call.1} parent=0
    #allocation2 [shape = 'u8[512]{0}', space=smem, size = 0x200, scoped, tag = 'input window, operand 0, single buffered']
    #allocation3 [shape = 's32[1]{0}', space=sflag, size = 0x4, scoped, tag = 'scoped memory for tpu_custom_call.1']
    #allocation4 [shape = 's32[1]{0}', space=sflag, size = 0x4, scoped, tag = 'scoped memory for tpu_custom_call.1']
    #allocation5 [shape = 's32[1]{0}', space=sflag, size = 0x4, scoped, tag = 'scoped memory for tpu_custom_call.1']
    #allocation6 [shape = 'u8[8192]{0}', space=vmem, size = 0x2000, scoped, tag = 'input window, operand 1, single buffered']
    #allocation7 [shape = 'u8[8192]{0}', space=vmem, size = 0x2000, scoped, tag = 'output window, operand 0, single buffered']
    %7 = vsyncpa [#allocation5], 0
    %8 = vsyncpa [#allocation3], 0
    %9 = vsyncpa [#allocation4], 0
    // Predicated region
    $region2: #{tpu_custom_call.1} parent=1 // pred_check
      _
    $region3: #{tpu_custom_call.1} parent=1 // pred_check_branch
      %11 = sbr.rel (0) target = $region5
    $region4: #{tpu_custom_call.1} parent=1 // pred_region
      %13 = vsyncadd [#allocation5], 0
      %s15 = sshll.u32 %s0, 4
      %s16 = int_to_ptr.hbm [resolvable:$true] %s15
      %18 = dma.hbm_to_smem %s16, 16, [#allocation2], [#allocation5]
    $region5: #{tpu_custom_call.1} parent=1 // pred_fallthru
      _
    // Predicated region
    $region6: #{tpu_custom_call.1} parent=1 // pred_check
      _
    $region7: #{tpu_custom_call.1} parent=1 // pred_check_branch
      %20 = sbr.rel (0) target = $region9
    $region8: #{tpu_custom_call.1} parent=1 // pred_region
      %22 = vsyncadd [#allocation3], 0
      %s24 = sshll.u32 %s1, 4
      %s25 = int_to_ptr.hbm [resolvable:$true] %s24
      %s26 = sshll.u32 [#allocation6], 4
      %s27 = int_to_ptr.vmem [resolvable:$true] %s26
      %29 = dma.hbm_to_vmem [thread:$0]  %s25, 256, %s27, [#allocation3]
    $region9: #{tpu_custom_call.1} parent=1 // pred_fallthru
      _
    // Predicated region
    $region10: #{tpu_custom_call.1} parent=1 // pred_check
      _
    $region11: #{tpu_custom_call.1} parent=1 // pred_check_branch
      %31 = sbr.rel (0) target = $region13
    $region12: #{tpu_custom_call.1} parent=1 // pred_region
      %33 = dma.done [#allocation5], 16
    $region13: #{tpu_custom_call.1} parent=1 // pred_fallthru
      _
    // Predicated region
    $region14: #{tpu_custom_call.1} parent=1 // pred_check
      _
    $region15: #{tpu_custom_call.1} parent=1 // pred_check_branch
      %35 = sbr.rel (0) target = $region17
    $region16: #{tpu_custom_call.1} parent=1 // pred_region
      %37 = dma.done [#allocation3], 256
    $region17: #{tpu_custom_call.1} parent=1 // pred_fallthru
      _
    %38 = sfence
    %s39 = sld [smem:[#allocation2]]
    %s40 = sld [smem:[#allocation2 + $0x1]]
    %s41 = sld [smem:[#allocation2 + $0x2]]
    %v42 = vld [vmem:[#allocation6] sm:$0xff]
    %v43 = vld [vmem:[#allocation6 + $0x8] sm:$0xff]
    %v44 = vstv %s39
    %v45 = vmul.f32 %v44, %v42
    %v46 = vmul.f32 %v44, %v43
    %v47 = vstv %s40
    %v48 = vadd.f32 %v45, %v47
    %v49 = vadd.f32 %v46, %v47
    %v50 = vmul.f32 %v48, %v42
    %v51 = vmul.f32 %v49, %v43
    %v52 = vstv %s41
    %v53 = vadd.f32 %v50, %v52
    %v54 = vadd.f32 %v51, %v52
    %55 = vst [vmem:[#allocation7] sm:$0xff] %v53
    %56 = vst [vmem:[#allocation7 + $0x8] sm:$0xff] %v54
    // Predicated region
    $region18: #{tpu_custom_call.1} parent=1 // pred_check
      _
    $region19: #{tpu_custom_call.1} parent=1 // pred_check_branch
      %58 = sbr.rel (0) target = $region21
    $region20: #{tpu_custom_call.1} parent=1 // pred_region
      %60 = vsyncadd [#allocation4], 0
      %s62 = sshll.u32 [#allocation7], 4
      %s63 = int_to_ptr.vmem [resolvable:$true] %s62
      %s64 = sshll.u32 %s2, 4
      %s65 = int_to_ptr.hbm [resolvable:$true] %s64
      %67 = dma.vmem_to_hbm [thread:$0]  %s63, 256, %s65, [#allocation4]
    $region21: #{tpu_custom_call.1} parent=1 // pred_fallthru
      _
    // Predicated region
    $region22: #{tpu_custom_call.1} parent=1 // pred_check
      _
    $region23: #{tpu_custom_call.1} parent=1 // pred_check_branch
      %69 = sbr.rel (0) target = $region25
    $region24: #{tpu_custom_call.1} parent=1 // pred_region
      %71 = dma.done [#allocation4], 256
    $region25: #{tpu_custom_call.1} parent=1 // pred_fallthru
      _
    %72 = vsyncpa [#allocation3], 1
    %73 = vsyncpa [#allocation4], 1
    %74 = vsyncpa [#allocation5], 1

</llo_original>
